<compile_context>
chip_gen: v7x
topology: tpu7x:2x2x1
jax: 0.10.0
libtpu: 0.0.40
codegen_flags: <defaults>
</compile_context>

<pallas_src>
import jax
import jax.numpy as jnp
from jax.experimental import pallas as pl
from jax.experimental.pallas import tpu as pltpu


def _round_up(x, m):
    return ((x + m - 1) // m) * m


# ----------------------------------------------------------------------------- kernel
def _msa_features_emb_kernel(x_ref, pad_ref, w_ref, o_ref):
    """Fused MSA_features_emb row tile:  (x * pad) @ W_fused."""
    xm = x_ref[...] * pad_ref[...]                     # (tm, A) f32 mask multiply (VPU)
    o_ref[...] = jnp.dot(xm.astype(w_ref.dtype), w_ref[...],
                         preferred_element_type=jnp.float32).astype(o_ref.dtype)


# ----------------------------------------------------------------------------- wrapper
def msa_features_emb(params, msa_onehot, residue_indexs, *, tm=2048,
                     compute_dtype=jnp.bfloat16, out_dtype=jnp.float32):
    """Pallas forward of MSA_features_emb.

    msa_onehot:     [B, N, L, A] soft one-hot of generated sequences
    residue_indexs: [B, L] int, padding positions == -100
    returns:        [B, N, L, d] (out_dtype, default float32)

    NOTE: the single-matmul fold (W_emb @ W_s_top) is only valid while the module's
    chem features and positional encoding are zero (they are undefined in the source).
    """
    B, N, L, A = msa_onehot.shape
    d = params["msa_emb_w"].shape[1]
    M = B * N * L

    # Fold both linears into one (A, d) weight (chem == 0 => only msa_s_w[:d] matters).
    w_fused = (params["msa_emb_w"].astype(jnp.float32)
               @ params["msa_s_w"][:d, :].astype(jnp.float32)).astype(compute_dtype)

    # No dtype cast here (would write an extra full [M, A] copy to HBM); cast is in-kernel.
    x = msa_onehot.reshape(M, A)
    pad = (residue_indexs != -100).astype(x.dtype)                     # [B, L]
    pad = jnp.broadcast_to(pad[:, None, :], (B, N, L)).reshape(M, 1)   # [M, 1] per-row mask

    # Row tiling: big lane-wide tiles (fewer ~0.35us grid steps), cdiv grid, ragged last
    # block handled by Pallas's masked stores — no wrapper-side jnp.pad of x.
    tm = max(8, min(_round_up(tm, 8), _round_up(M, 8)))
    grid = (pl.cdiv(M, tm),)

    out = pl.pallas_call(
        _msa_features_emb_kernel,
        out_shape=jax.ShapeDtypeStruct((M, d), out_dtype),
        grid=grid,
        in_specs=[
            pl.BlockSpec((tm, A), lambda i: (i, 0)),       # onehot row tile
            pl.BlockSpec((tm, 1), lambda i: (i, 0)),       # padding mask
            pl.BlockSpec((A, d), lambda i: (0, 0)),        # grid-invariant fused weight
        ],
        out_specs=pl.BlockSpec((tm, d), lambda i: (i, 0)),
        compiler_params=pltpu.CompilerParams(
            dimension_semantics=("parallel",)),            # shard rows across TCs (v7x)
    )(x, pad, w_fused)

    return out.reshape(B, N, L, d)


# ----------------------------------------------------------------------------- reference
def msa_features_emb_ref(params, msa_onehot, residue_indexs):
    """Pure-JAX mirror of the PyTorch forward (chem / pos substituted with zeros)."""
    B, N, L, A = msa_onehot.shape
    msa = msa_onehot.astype(jnp.float32) @ params["msa_emb_w"]
    chem = jnp.zeros_like(msa)                      # TODO(synk): add_chem_features
    cat = jnp.concatenate([msa, chem], axis=-1)
    mask = (residue_indexs != -100).astype(jnp.float32)[:, None, :, None]
    cat = cat * mask
    pos = jnp.zeros_like(cat)                       # TODO(synk): light_PositionalEncoding
    return (cat + pos) @ params["msa_s_w"]


def init_params(key, msa_dim, onehot_dim=21):
    k1, k2 = jax.random.split(key)
    return {
        "msa_emb_w": (0.1 * jax.random.normal(k1, (onehot_dim, msa_dim))).astype(jnp.float32),
        "msa_s_w": (0.1 * jax.random.normal(k2, (2 * msa_dim, msa_dim))).astype(jnp.float32),
    }


# ----------------------------------------------------------------------------- main
if __name__ == "__main__":
    key = jax.random.PRNGKey(0)
    B, N, L, A = 2, 3, 16, 21
    d_msa = 128   # multiple of 128 -> lane-dense output stores

    k1, kp = jax.random.split(key)
    msa_onehot = jax.nn.softmax(jax.random.normal(k1, (B, N, L, A)), axis=-1)
    residue_indexs = jnp.broadcast_to(jnp.arange(L, dtype=jnp.int32), (B, L))
    residue_indexs = residue_indexs.at[1, -2:].set(-100)   # a couple of padded positions

    params = init_params(kp, d_msa)

    out = msa_features_emb(params, msa_onehot, residue_indexs)
    out = jax.block_until_ready(out)

    ref = msa_features_emb_ref(params, msa_onehot, residue_indexs)
    assert out.shape == (B, N, L, d_msa)
    err = float(jnp.max(jnp.abs(out - ref)))
    assert jnp.allclose(out, ref, atol=1e-2, rtol=1e-2), f"max abs err {err}"
    print("KERNEL_OK")
</pallas_src>

<mosaic_0001>
module attributes {stable_mosaic.version = 11 : i64} {
  func.func @_msa_features_emb_kernel(%arg0: i32, %arg1: memref<96x21xf32, #tpu.memory_space<vmem>>, %arg2: memref<96x1xf32, #tpu.memory_space<vmem>>, %arg3: memref<21x128xbf16, #tpu.memory_space<vmem>>, %arg4: memref<96x128xf32, #tpu.memory_space<vmem>>) attributes {dimension_semantics = [#tpu.dimension_semantics<parallel>], iteration_bounds = array<i64: 1>, scalar_prefetch = 0 : i64, scratch_operands = 0 : i64, tpu.core_type = #tpu.core_type<tc>, window_params = [{transform_indices = @transform_0, window_bounds = array<i64: 96, 21>}, {transform_indices = @transform_1, window_bounds = array<i64: 96, 1>}, {pipeline_mode = #tpu.pipeline_mode<synchronous>, transform_indices = @transform_2, window_bounds = array<i64: 21, 128>}, {transform_indices = @transform_3, window_bounds = array<i64: 96, 128>}]} {
    %c0 = arith.constant 0 : index
    %c0_0 = arith.constant 0 : index
    %0 = vector.load %arg1[%c0, %c0_0] : memref<96x21xf32, #tpu.memory_space<vmem>>, vector<96x21xf32>
    %c0_1 = arith.constant 0 : index
    %c0_2 = arith.constant 0 : index
    %1 = vector.load %arg2[%c0_1, %c0_2] : memref<96x1xf32, #tpu.memory_space<vmem>>, vector<96x1xf32>
    %2 = vector.broadcast %1 : vector<96x1xf32> to vector<96x21xf32>
    %3 = arith.mulf %0, %2 : vector<96x21xf32>
    %4 = arith.truncf %3 : vector<96x21xf32> to vector<96x21xbf16>
    %c0_3 = arith.constant 0 : index
    %c0_4 = arith.constant 0 : index
    %5 = vector.load %arg3[%c0_3, %c0_4] : memref<21x128xbf16, #tpu.memory_space<vmem>>, vector<21x128xbf16>
    %cst = arith.constant dense<0.000000e+00> : vector<96x128xf32>
    %6 = tpu.matmul %4, %5, %cst {dimension_numbers = #tpu.dot_dimension_numbers<[1], [0], [0], [1], [0, 0, 1, 1], [], []>} : vector<96x21xbf16>, vector<21x128xbf16>, vector<96x128xf32> -> vector<96x128xf32>
    %c0_5 = arith.constant 0 : index
    %c0_6 = arith.constant 0 : index
    %7 = vector.load %arg4[%c0_5, %c0_6] : memref<96x128xf32, #tpu.memory_space<vmem>>, vector<96x128xf32>
    tpu.vector_store %arg4[%c0_5, %c0_6], %6 {strides = array<i32>} : memref<96x128xf32, #tpu.memory_space<vmem>>, vector<96x128xf32>,
    return
  }
  func.func @transform_0(%arg0: i32) -> (i32, i32) {
    %c0_i32 = arith.constant 0 : i32
    %c0_i32_0 = arith.constant 0 : i32
    return %arg0, %c0_i32 : i32, i32
  }
  func.func @transform_1(%arg0: i32) -> (i32, i32) {
    %c0_i32 = arith.constant 0 : i32
    %c0_i32_0 = arith.constant 0 : i32
    return %arg0, %c0_i32 : i32, i32
  }
  func.func @transform_2(%arg0: i32) -> (i32, i32) {
    %c0_i32 = arith.constant 0 : i32
    %c0_i32_0 = arith.constant 0 : i32
    %c0_i32_1 = arith.constant 0 : i32
    return %c0_i32, %c0_i32_0 : i32, i32
  }
  func.func @transform_3(%arg0: i32) -> (i32, i32) {
    %c0_i32 = arith.constant 0 : i32
    %c0_i32_0 = arith.constant 0 : i32
    return %arg0, %c0_i32 : i32, i32
  }
}

</mosaic_0001>

<llo_original>
// kernel: tpu_custom_call.1
$region0: #{tpu_custom_call.1}
  #allocation0 [shape = 'u32[]', space=smem, size = 0x4, offset = 0x4, fixed_abs, tag = 'smem constant byte address 0x4 - core index']
  #allocation1 [shape = 'u32[144,128]{1,0:T(1,128)}', space=vmem, size = 0x12000, scoped, tag = 'internal scratch']
  %s0 = inlined_call_operand.vmem [shape: f32[96,21], index: 0, kind: input, shape index: {}]
  %s1 = inlined_call_operand.vmem [shape: f32[96,1], index: 1, kind: input, shape index: {}]
  %s2 = inlined_call_operand.vmem [shape: bf16[21,128], index: 2, kind: input, shape index: {}]
  %s3 = inlined_call_operand.hbm [shape: f32[96,128], index: 3, kind: output, shape index: {}]
  %s4 = sld [smem:[#allocation0]]
  $region22: #{tpu_custom_call.1} parent=0
    _
  %s6 = ssub.s32 1, %s4
  %s7 = scalar_select 0, %s6, %s4
  $region1: #{tpu_custom_call.1} parent=0
    #allocation2 [shape = 'u8[49152]{0}', space=vmem, size = 0xc000, scoped, tag = 'output window, operand 0, single buffered']
    #allocation3 [shape = 's32[1]{0}', space=sflag, size = 0x4, scoped, tag = 'scoped memory for tpu_custom_call.1']
    %8 = vsyncpa [#allocation3], 0
    // Predicated region
    $region2: #{tpu_custom_call.1} parent=1 // pred_check
      _
    $region3: #{tpu_custom_call.1} parent=1 // pred_check_branch
      %10 = sbr.rel (0) target = $region5
    $region4: #{tpu_custom_call.1} parent=1 // pred_region
      _
    $region5: #{tpu_custom_call.1} parent=1 // pred_fallthru
      _
    // Predicated region
    $region6: #{tpu_custom_call.1} parent=1 // pred_check
      _
    $region7: #{tpu_custom_call.1} parent=1 // pred_check_branch
      %12 = sbr.rel (0) target = $region9
    $region8: #{tpu_custom_call.1} parent=1 // pred_region
      _
    $region9: #{tpu_custom_call.1} parent=1 // pred_fallthru
      _
    // Predicated region
    $region10: #{tpu_custom_call.1} parent=1 // pred_check
      _
    $region11: #{tpu_custom_call.1} parent=1 // pred_check_branch
      %14 = sbr.rel (0) target = $region13
    $region12: #{tpu_custom_call.1} parent=1 // pred_region
      _
    $region13: #{tpu_custom_call.1} parent=1 // pred_fallthru
      _
    %v16 = vld [vmem:[%s0] sm:$0xff]
    %v17 = vld [vmem:[%s0 + $0x8] sm:$0xff]
    %v18 = vld [vmem:[%s0 + $0x10] sm:$0xff]
    %v19 = vld [vmem:[%s0 + $0x18] sm:$0xff]
    %v20 = vld [vmem:[%s0 + $0x20] sm:$0xff]
    %v21 = vld [vmem:[%s0 + $0x28] sm:$0xff]
    %v22 = vld [vmem:[%s0 + $0x30] sm:$0xff]
    %v23 = vld [vmem:[%s0 + $0x38] sm:$0xff]
    %v24 = vld [vmem:[%s0 + $0x40] sm:$0xff]
    %v25 = vld [vmem:[%s0 + $0x48] sm:$0xff]
    %v26 = vld [vmem:[%s0 + $0x50] sm:$0xff]
    %v27 = vld [vmem:[%s0 + $0x58] sm:$0xff]
    %v28 = vld [vmem:[%s1] sm:$0xff]
    %v29 = vld [vmem:[%s1 + $0x8] sm:$0xff]
    %v30 = vld [vmem:[%s1 + $0x10] sm:$0xff]
    %v31 = vld [vmem:[%s1 + $0x18] sm:$0xff]
    %v32 = vld [vmem:[%s1 + $0x20] sm:$0xff]
    %v33 = vld [vmem:[%s1 + $0x28] sm:$0xff]
    %v34 = vld [vmem:[%s1 + $0x30] sm:$0xff]
    %v35 = vld [vmem:[%s1 + $0x38] sm:$0xff]
    %v36 = vld [vmem:[%s1 + $0x40] sm:$0xff]
    %v37 = vld [vmem:[%s1 + $0x48] sm:$0xff]
    %v38 = vld [vmem:[%s1 + $0x50] sm:$0xff]
    %v39 = vld [vmem:[%s1 + $0x58] sm:$0xff]
    %41 = vset.pattern.permute.xlu0 0
    %42 = vperm.xlu0 %41, %v28
    %v43 = vpop.permute.xlu0 %42
    %46 = vset.pattern.permute.xlu0 0
    %47 = vperm.xlu0 %46, %v29
    %v48 = vpop.permute.xlu0 %47
    %51 = vset.pattern.permute.xlu0 0
    %52 = vperm.xlu0 %51, %v30
    %v53 = vpop.permute.xlu0 %52
    %56 = vset.pattern.permute.xlu0 0
    %57 = vperm.xlu0 %56, %v31
    %v58 = vpop.permute.xlu0 %57
    %61 = vset.pattern.permute.xlu0 0
    %62 = vperm.xlu0 %61, %v32
    %v63 = vpop.permute.xlu0 %62
    %66 = vset.pattern.permute.xlu0 0
    %67 = vperm.xlu0 %66, %v33
    %v68 = vpop.permute.xlu0 %67
    %71 = vset.pattern.permute.xlu0 0
    %72 = vperm.xlu0 %71, %v34
    %v73 = vpop.permute.xlu0 %72
    %76 = vset.pattern.permute.xlu0 0
    %77 = vperm.xlu0 %76, %v35
    %v78 = vpop.permute.xlu0 %77
    %81 = vset.pattern.permute.xlu0 0
    %82 = vperm.xlu0 %81, %v36
    %v83 = vpop.permute.xlu0 %82
    %86 = vset.pattern.permute.xlu0 0
    %87 = vperm.xlu0 %86, %v37
    %v88 = vpop.permute.xlu0 %87
    %91 = vset.pattern.permute.xlu0 0
    %92 = vperm.xlu0 %91, %v38
    %v93 = vpop.permute.xlu0 %92
    %96 = vset.pattern.permute.xlu0 0
    %97 = vperm.xlu0 %96, %v39
    %v98 = vpop.permute.xlu0 %97
    %v100 = vmul.f32 %v16, %v43
    %v101 = vmul.f32 %v17, %v48
    %v102 = vmul.f32 %v18, %v53
    %v103 = vmul.f32 %v19, %v58
    %v104 = vmul.f32 %v20, %v63
    %v105 = vmul.f32 %v21, %v68
    %v106 = vmul.f32 %v22, %v73
    %v107 = vmul.f32 %v23, %v78
    %v108 = vmul.f32 %v24, %v83
    %v109 = vmul.f32 %v25, %v88
    %v110 = vmul.f32 %v26, %v93
    %v111 = vmul.f32 %v27, %v98
    %v112 = vpack.c.bf16 %v101, %v100
    %v113 = vpack.c.bf16 %v103, %v102
    %v114 = vpack.c.bf16 %v105, %v104
    %v115 = vpack.c.bf16 %v107, %v106
    %v116 = vpack.c.bf16 %v109, %v108
    %v117 = vpack.c.bf16 %v111, %v110
    %v118 = vld [vmem:[%s2] sm:$0xf]
    %v119 = vld [vmem:[%s2 + $0x4] sm:$0xf]
    %v120 = vld [vmem:[%s2 + $0x8] sm:$0x7]
    %v124 = vunpack.c.l.b16 %v118
    %v125 = vunpack.c.l.b16 %v119
    %v126 = vunpack.c.l.b16 %v120
    %v127 = vpack.c.b16 %v125, %v124
    %v128 = vpack.c.b16 %v126, %v126
    %vm130 = vcmask 171008
    %v132 = vsel %vm130, %v112, 0
    %v135 = vsel %vm130, %v113, 0
    %v138 = vsel %vm130, %v114, 0
    %v141 = vsel %vm130, %v115, 0
    %v144 = vsel %vm130, %v116, 0
    %v147 = vsel %vm130, %v117, 0
    %vm149 = vcmask 1041408
    %vm150 = vcmask 1042432
    %v151 = vsel %vm149, 4294967295, 65535
    %v152 = vsel %vm150, %v151, 0
    %v154 = vand.u32 %v128, %v152
    %156 = vmatprep.subr.bf16.mxu0 0
    %157 = vmatpush1.bf16.msra.mxu0 %v127
    %158 = vmatprep.subr.bf16.mxu0 0
    %159 = vmatpush1.bf16.msra.mxu0 %v154
    %160 = vmatprep.subr.bf16.mxu0 0
    %161 = vmatpush1.bf16.msra.mxu0 0
    %162 = vmatprep.subr.bf16.mxu0 0
    %163 = vmatpush1.bf16.msra.mxu0 0
    %164 = vmatprep.subr.bf16.mxu0 0
    %165 = vmatpush1.bf16.msra.mxu0 0
    %166 = vmatprep.subr.bf16.mxu0 0
    %167 = vmatpush1.bf16.msra.mxu0 0
    %168 = vmatprep.subr.bf16.mxu0 0
    %169 = vmatpush1.bf16.msra.mxu0 0
    %170 = vmatprep.subr.bf16.mxu0 0
    %171 = vmatpush1.bf16.msra.mxu0 0
    %172 = vmatprep.subr.bf16.mxu0 0
    %173 = vmatpush1.bf16.msra.mxu0 0
    %174 = vmatprep.subr.bf16.mxu0 0
    %175 = vmatpush1.bf16.msra.mxu0 0
    %176 = vmatprep.subr.bf16.mxu0 0
    %177 = vmatpush1.bf16.msra.mxu0 0
    %178 = vmatprep.subr.bf16.mxu0 0
    %179 = vmatpush1.bf16.msra.mxu0 0
    %180 = vmatprep.subr.bf16.mxu0 0
    %181 = vmatpush1.bf16.msra.mxu0 0
    %182 = vmatprep.subr.bf16.mxu0 0
    %183 = vmatpush1.bf16.msra.mxu0 0
    %184 = vmatprep.subr.bf16.mxu0 0
    %185 = vmatpush1.bf16.msra.mxu0 0
    %186 = vmatprep.subr.bf16.mxu0 0
    %187 = vmatpush1.bf16.msra.mxu0 0
    %188 = vmatprep.mubr.bf16.mxu0 0
    %189 = vmatmul.mubr.bf16.gmra.mrb[0].mxu0 %v132
    %v190 = vpop.f32.mrb[0].mxu0
    %v191 = vadd.f32 0.0, %v190
    %v192 = vpop.f32.mrb[0].mxu0
    %v193 = vpop.f32.mrb[0].mxu0
    %v194 = vadd.f32 0.0, %v193
    %v195 = vpop.f32.mrb[0].mxu0
    %196 = vmatprep.mubr.bf16.mxu0 0
    %197 = vmatmul.mubr.bf16.gmra.mrb[0].mxu0 %v135
    %v198 = vpop.f32.mrb[0].mxu0
    %v199 = vadd.f32 0.0, %v198
    %v200 = vpop.f32.mrb[0].mxu0
    %v201 = vpop.f32.mrb[0].mxu0
    %v202 = vadd.f32 0.0, %v201
    %v203 = vpop.f32.mrb[0].mxu0
    %204 = vmatprep.mubr.bf16.mxu0 0
    %205 = vmatmul.mubr.bf16.gmra.mrb[0].mxu0 %v138
    %v206 = vpop.f32.mrb[0].mxu0
    %v207 = vadd.f32 0.0, %v206
    %v208 = vpop.f32.mrb[0].mxu0
    %v209 = vpop.f32.mrb[0].mxu0
    %v210 = vadd.f32 0.0, %v209
    %v211 = vpop.f32.mrb[0].mxu0
    %212 = vmatprep.mubr.bf16.mxu0 0
    %213 = vmatmul.mubr.bf16.gmra.mrb[0].mxu0 %v141
    %v214 = vpop.f32.mrb[0].mxu0
    %v215 = vadd.f32 0.0, %v214
    %v216 = vpop.f32.mrb[0].mxu0
    %v217 = vpop.f32.mrb[0].mxu0
    %v218 = vadd.f32 0.0, %v217
    %v219 = vpop.f32.mrb[0].mxu0
    %220 = vmatprep.mubr.bf16.mxu0 0
    %221 = vmatmul.mubr.bf16.gmra.mrb[0].mxu0 %v144
    %v222 = vpop.f32.mrb[0].mxu0
    %v223 = vadd.f32 0.0, %v222
    %v224 = vpop.f32.mrb[0].mxu0
    %v225 = vpop.f32.mrb[0].mxu0
    %v226 = vadd.f32 0.0, %v225
    %v227 = vpop.f32.mrb[0].mxu0
    %228 = vmatprep.mubr.bf16.mxu0 0
    %229 = vmatmul.mubr.bf16.gmra.mrb[0].mxu0 %v147
    %v230 = vpop.f32.mrb[0].mxu0
    %v231 = vadd.f32 0.0, %v230
    %v232 = vpop.f32.mrb[0].mxu0
    %v233 = vpop.f32.mrb[0].mxu0
    %v234 = vadd.f32 0.0, %v233
    %v235 = vpop.f32.mrb[0].mxu0
    %236 = vdwg.mxu0
    %237 = vst [vmem:[#allocation2] sm:$0xff] %v191
    %238 = vst [vmem:[#allocation2 + $0x8] sm:$0xff] %v194
    %239 = vst [vmem:[#allocation2 + $0x10] sm:$0xff] %v199
    %240 = vst [vmem:[#allocation2 + $0x18] sm:$0xff] %v202
    %241 = vst [vmem:[#allocation2 + $0x20] sm:$0xff] %v207
    %242 = vst [vmem:[#allocation2 + $0x28] sm:$0xff] %v210
    %243 = vst [vmem:[#allocation2 + $0x30] sm:$0xff] %v215
    %244 = vst [vmem:[#allocation2 + $0x38] sm:$0xff] %v218
    %245 = vst [vmem:[#allocation2 + $0x40] sm:$0xff] %v223
    %246 = vst [vmem:[#allocation2 + $0x48] sm:$0xff] %v226
    %247 = vst [vmem:[#allocation2 + $0x50] sm:$0xff] %v231
    %248 = vst [vmem:[#allocation2 + $0x58] sm:$0xff] %v234
    // Predicated region
    $region14: #{tpu_custom_call.1} parent=1 // pred_check
      _
    $region15: #{tpu_custom_call.1} parent=1 // pred_check_branch
      %250 = sbr.rel (0) target = $region17
    $region16: #{tpu_custom_call.1} parent=1 // pred_region
      %s252 = ssub.s32 1536, 1536
      %253 = vsyncadd [#allocation3], %s252
      %s254 = sshll.u32 [#allocation2], 4
      %s255 = int_to_ptr.vmem [resolvable:$true] %s254
      %260 = dma.vmem_to_hbm [thread:$0]  %s255, 1536, %s3, [#allocation3], 128, 128, 8
    $region17: #{tpu_custom_call.1} parent=1 // pred_fallthru
      _
    // Predicated region
    $region18: #{tpu_custom_call.1} parent=1 // pred_check
      _
    $region19: #{tpu_custom_call.1} parent=1 // pred_check_branch
      %262 = sbr.rel (0) target = $region21
    $region20: #{tpu_custom_call.1} parent=1 // pred_region
      %263 = dma.done [#allocation3], 1536
    $region21: #{tpu_custom_call.1} parent=1 // pred_fallthru
      _
    %264 = vsyncpa [#allocation3], 1

</llo_original>
